<compile_context>
chip_gen: v7x
topology: tpu7x:2x2x1
jax: 0.10.0
libtpu: 0.0.40
codegen_flags: <defaults>
</compile_context>

<pallas_src>
import functools

import jax
import jax.numpy as jnp
from jax import lax
from jax.experimental import pallas as pl
from jax.experimental.pallas import tpu as pltpu


def _round_up(v, m):
    return (v + m - 1) // m * m


def _vmem_capacity_bytes():
    """Physical VMEM per TensorCore, with a conservative (v7x) fallback."""
    try:
        info = pltpu.get_tpu_info()
        for attr in ("vmem_capacity_bytes", "vmem_bytes", "vmem_size_bytes"):
            val = getattr(info, attr, None)
            if val:
                return int(val)
    except Exception:
        pass
    return 64 * 1024 * 1024


def _speaker_kernel(x_ref, w1_ref, b1_ref, w2_ref, b2_ref, o_ref, acc_ref, *,
                    inv_t, total_t, t_tile, mask_time):
    # Grid: (batch tiles [parallel], time tiles [arbitrary / reduction]).
    t = pl.program_id(1)

    # Zero the pooled-sum accumulator on the first T step of each batch tile.
    @pl.when(t == 0)
    def _():
        acc_ref[...] = jnp.zeros_like(acc_ref)

    # Partial temporal sum: (Bt, Tt, F) native dtype -> f32 in-register.
    xb = x_ref[...].astype(jnp.float32)
    if mask_time:
        # Ragged last T tile: out-of-bounds block contents are unspecified,
        # so zero the frames past the true sequence length.
        tids = lax.broadcasted_iota(jnp.int32, (t_tile, 1), 0) + t * t_tile
        xb = jnp.where((tids < total_t)[None, :, :], xb, 0.0)
    acc_ref[...] += jnp.sum(xb, axis=1)

    # Finalize once, on the last T step: mean, 2 matmuls + bias, ReLU, L2-norm.
    @pl.when(t == pl.num_programs(1) - 1)
    def _():
        pooled = acc_ref[...] * inv_t                                  # (Bt, F)
        h = jnp.dot(pooled, w1_ref[...],
                    preferred_element_type=jnp.float32) + b1_ref[...]  # (Bt, Hp)
        h = jnp.maximum(h, 0.0)
        e = jnp.dot(h, w2_ref[...],
                    preferred_element_type=jnp.float32) + b2_ref[...]  # (Bt, Ep)
        inv_norm = lax.rsqrt(jnp.sum(e * e, axis=-1, keepdims=True) + 1e-12)
        o_ref[...] = (e * inv_norm).astype(o_ref.dtype)


def prepare_params(params):
    """One-time lane-dense (x128) padding of the module parameters.

    Call once at init and keep the padded tensors as the stored parameters,
    so there is no per-call padding work in front of the pallas_call.  Zero
    padding of weight cols/rows and biases keeps the padded H/E columns
    exactly zero, so ReLU and the L2-norm are unchanged.
    """
    w1, b1, w2, b2 = params
    feat, hidden = w1.shape
    emb = w2.shape[1]
    hp, ep = _round_up(hidden, 128), _round_up(emb, 128)
    w1p = jnp.zeros((feat, hp), jnp.float32).at[:, :hidden].set(w1.astype(jnp.float32))
    b1p = jnp.zeros((1, hp), jnp.float32).at[0, :hidden].set(b1.astype(jnp.float32))
    w2p = jnp.zeros((hp, ep), jnp.float32).at[:hidden, :emb].set(w2.astype(jnp.float32))
    b2p = jnp.zeros((1, ep), jnp.float32).at[0, :emb].set(b2.astype(jnp.float32))
    return (w1p, b1p, w2p, b2p), emb


def wrapped_model_forward(x, padded_params, emb_dim, label=None, *,
                          b_tile=None, t_tile=None):
    """WrappedModel.forward(x, label) == module(x, label); label is unused."""
    del label  # label=None path of the wrapped module
    w1p, b1p, w2p, b2p = padded_params
    B, T, F = x.shape
    Hp = w1p.shape[1]
    Ep = w2p.shape[1]
    itemsize = x.dtype.itemsize

    # --- Chip-adaptive VMEM budget ---------------------------------------
    vmem_cap = _vmem_capacity_bytes()
    # x is double-buffered by the pipeline; keep one x tile at ~1/8 of VMEM
    # (v7x 64 MiB -> 8 MiB tile, v5e/v6e 128 MiB -> 16 MiB tile).
    x_budget = min(16 * 1024 * 1024, vmem_cap // 8)
    vmem_limit = min((vmem_cap * 3) // 4, 96 * 1024 * 1024)

    # --- Batch tile: sublane-aligned, megacore-balanced --------------------
    if b_tile is None:
        if B <= 8:
            b_tile = B                       # exact single tile, no ragged rows
        else:
            b_tile = min(128, _round_up(B, 8))
            if pl.cdiv(B, b_tile) < 2:
                # Ensure >= 2 tiles on the "parallel" axis (feed both v7x TCs).
                b_tile = _round_up(pl.cdiv(B, 2), 8)

    # --- Time tile: reduction axis, sized to the x-tile budget -------------
    if t_tile is None:
        t_fit = (x_budget // max(1, b_tile * F * itemsize)) // 8 * 8
        t_tile = max(8, min(_round_up(T, 8), t_fit))
    mask_time = (T % t_tile) != 0

    grid = (pl.cdiv(B, b_tile), pl.cdiv(T, t_tile))
    Bp = grid[0] * b_tile

    kernel = functools.partial(_speaker_kernel, inv_t=1.0 / T, total_t=T,
                               t_tile=t_tile, mask_time=mask_time)

    out = pl.pallas_call(
        kernel,
        out_shape=jax.ShapeDtypeStruct((Bp, Ep), jnp.float32),
        grid_spec=pltpu.PrefetchScalarGridSpec(
            num_scalar_prefetch=0,
            grid=grid,
            in_specs=[
                # x streams straight from HBM in its native dtype; the full
                # (unpadded) feature dim as the last block dim is legal.
                pl.BlockSpec((b_tile, t_tile, F), lambda b, t: (b, t, 0)),
                # Weights / biases: small, fully resident, constant block.
                pl.BlockSpec((F, Hp), lambda b, t: (0, 0)),
                pl.BlockSpec((1, Hp), lambda b, t: (0, 0)),
                pl.BlockSpec((Hp, Ep), lambda b, t: (0, 0)),
                pl.BlockSpec((1, Ep), lambda b, t: (0, 0)),
            ],
            # Same output block across the T axis -> resident accumulator
            # semantics; written once on the last T step (lane-dense vst).
            out_specs=pl.BlockSpec((b_tile, Ep), lambda b, t: (b, 0)),
            scratch_shapes=[pltpu.VMEM((b_tile, F), jnp.float32)],
        ),
        compiler_params=pltpu.CompilerParams(
            dimension_semantics=("parallel", "arbitrary"),
            vmem_limit_bytes=vmem_limit,
        ),
    )(x, w1p, b1p, w2p, b2p)

    # Strip batch / embedding padding (tiny output; any ragged batch rows
    # from an out-of-bounds input block are dropped here).
    return out[:B, :emb_dim]


def init_params(key, feat, hidden, emb):
    k1, k2, k3, k4 = jax.random.split(key, 4)
    w1 = jax.random.normal(k1, (feat, hidden), jnp.float32) * (1.0 / feat ** 0.5)
    b1 = jax.random.normal(k2, (hidden,), jnp.float32) * 0.01
    w2 = jax.random.normal(k3, (hidden, emb), jnp.float32) * (1.0 / hidden ** 0.5)
    b2 = jax.random.normal(k4, (emb,), jnp.float32) * 0.01
    return w1, b1, w2, b2


def _reference(x, params):
    w1, b1, w2, b2 = params
    pooled = jnp.mean(x.astype(jnp.float32), axis=1)
    h = jnp.maximum(pooled @ w1 + b1, 0.0)
    e = h @ w2 + b2
    return e / jnp.sqrt(jnp.sum(e * e, axis=-1, keepdims=True) + 1e-12)


if __name__ == "__main__":
    key = jax.random.PRNGKey(0)
    kx, kp = jax.random.split(key)

    B, T, F, H, E = 2, 8, 32, 64, 32
    x = jax.random.normal(kx, (B, T, F), jnp.float32)
    raw_params = init_params(kp, F, H, E)

    # One-time parameter padding (hoisted out of the per-call path).
    padded_params, emb_dim = prepare_params(raw_params)

    fwd = jax.jit(functools.partial(wrapped_model_forward, emb_dim=emb_dim))
    out = jax.block_until_ready(fwd(x, padded_params))
    assert out.shape == (B, E)

    # x now streams in f32 end-to-end, so compare against the pure-f32 forward.
    ref = jax.block_until_ready(_reference(x, raw_params))
    assert jnp.allclose(out, ref, atol=1e-3, rtol=1e-3), (
        float(jnp.max(jnp.abs(out - ref))))

    print("KERNEL_OK")
</pallas_src>

<mosaic_0001>
module attributes {stable_mosaic.version = 11 : i64} {
  func.func @_speaker_kernel(%arg0: i32, %arg1: i32, %arg2: memref<2x8x32xf32, #tpu.memory_space<vmem>>, %arg3: memref<32x128xf32, #tpu.memory_space<vmem>>, %arg4: memref<1x128xf32, #tpu.memory_space<vmem>>, %arg5: memref<128x128xf32, #tpu.memory_space<vmem>>, %arg6: memref<1x128xf32, #tpu.memory_space<vmem>>, %arg7: memref<2x128xf32, #tpu.memory_space<vmem>>, %arg8: memref<2x32xf32, #tpu.memory_space<vmem>>) attributes {dimension_semantics = [#tpu.dimension_semantics<parallel>, #tpu.dimension_semantics<arbitrary>], iteration_bounds = array<i64: 1, 1>, scalar_prefetch = 0 : i64, scratch_operands = 1 : i64, tpu.core_type = #tpu.core_type<tc>, window_params = [{transform_indices = @transform_0, window_bounds = array<i64: 2, 8, 32>}, {pipeline_mode = #tpu.pipeline_mode<synchronous>, transform_indices = @transform_1, window_bounds = array<i64: 32, 128>}, {pipeline_mode = #tpu.pipeline_mode<synchronous>, transform_indices = @transform_2, window_bounds = array<i64: 1, 128>}, {pipeline_mode = #tpu.pipeline_mode<synchronous>, transform_indices = @transform_3, window_bounds = array<i64: 128, 128>}, {pipeline_mode = #tpu.pipeline_mode<synchronous>, transform_indices = @transform_4, window_bounds = array<i64: 1, 128>}, {transform_indices = @transform_5, window_bounds = array<i64: 2, 128>}]} {
    %c0_i32 = arith.constant 0 : i32
    %0 = arith.cmpi eq, %arg1, %c0_i32 : i32
    %1 = arith.extui %0 : i1 to i32
    %c0_i32_0 = arith.constant 0 : i32
    %2 = arith.cmpi ne, %1, %c0_i32_0 : i32
    scf.if %2 {
      %cst_9 = arith.constant 0.000000e+00 : f32
      %11 = vector.broadcast %cst_9 : f32 to vector<2x32xf32>
      %c0_10 = arith.constant 0 : index
      %c0_11 = arith.constant 0 : index
      %12 = vector.load %arg8[%c0_10, %c0_11] : memref<2x32xf32, #tpu.memory_space<vmem>>, vector<2x32xf32>
      tpu.vector_store %arg8[%c0_10, %c0_11], %11 {strides = array<i32>} : memref<2x32xf32, #tpu.memory_space<vmem>>, vector<2x32xf32>,
    } else {
    }
    %c0 = arith.constant 0 : index
    %c0_1 = arith.constant 0 : index
    %c0_2 = arith.constant 0 : index
    %3 = vector.load %arg2[%c0, %c0_1, %c0_2] : memref<2x8x32xf32, #tpu.memory_space<vmem>>, vector<2x8x32xf32>
    %c0_3 = arith.constant 0 : index
    %c0_4 = arith.constant 0 : index
    %4 = vector.load %arg8[%c0_3, %c0_4] : memref<2x32xf32, #tpu.memory_space<vmem>>, vector<2x32xf32>
    %cst = arith.constant dense<0.000000e+00> : vector<2x32xf32>
    %5 = vector.multi_reduction <add>, %3, %cst [1] : vector<2x8x32xf32> to vector<2x32xf32>
    %6 = arith.addf %4, %5 : vector<2x32xf32>
    %c0_5 = arith.constant 0 : index
    %c0_6 = arith.constant 0 : index
    %7 = vector.load %arg8[%c0_5, %c0_6] : memref<2x32xf32, #tpu.memory_space<vmem>>, vector<2x32xf32>
    tpu.vector_store %arg8[%c0_5, %c0_6], %6 {strides = array<i32>} : memref<2x32xf32, #tpu.memory_space<vmem>>, vector<2x32xf32>,
    %c0_i32_7 = arith.constant 0 : i32
    %8 = arith.cmpi eq, %arg1, %c0_i32_7 : i32
    %9 = arith.extui %8 : i1 to i32
    %c0_i32_8 = arith.constant 0 : i32
    %10 = arith.cmpi ne, %9, %c0_i32_8 : i32
    scf.if %10 {
      %c0_9 = arith.constant 0 : index
      %c0_10 = arith.constant 0 : index
      %11 = vector.load %arg8[%c0_9, %c0_10] : memref<2x32xf32, #tpu.memory_space<vmem>>, vector<2x32xf32>
      %cst_11 = arith.constant 1.250000e-01 : f32
      %12 = vector.broadcast %cst_11 : f32 to vector<2x32xf32>
      %13 = arith.mulf %11, %12 : vector<2x32xf32>
      %c0_12 = arith.constant 0 : index
      %c0_13 = arith.constant 0 : index
      %14 = vector.load %arg3[%c0_12, %c0_13] : memref<32x128xf32, #tpu.memory_space<vmem>>, vector<32x128xf32>
      %cst_14 = arith.constant dense<0.000000e+00> : vector<2x128xf32>
      %15 = tpu.matmul %13, %14, %cst_14 {dimension_numbers = #tpu.dot_dimension_numbers<[1], [0], [0], [1], [0, 0, 1, 1], [], []>} : vector<2x32xf32>, vector<32x128xf32>, vector<2x128xf32> -> vector<2x128xf32>
      %c0_15 = arith.constant 0 : index
      %c0_16 = arith.constant 0 : index
      %16 = vector.load %arg4[%c0_15, %c0_16] : memref<1x128xf32, #tpu.memory_space<vmem>>, vector<1x128xf32>
      %17 = vector.broadcast %16 : vector<1x128xf32> to vector<2x128xf32>
      %18 = arith.addf %15, %17 : vector<2x128xf32>
      %cst_17 = arith.constant 0.000000e+00 : f32
      %19 = vector.broadcast %cst_17 : f32 to vector<2x128xf32>
      %20 = arith.maximumf %18, %19 : vector<2x128xf32>
      %c0_18 = arith.constant 0 : index
      %c0_19 = arith.constant 0 : index
      %21 = vector.load %arg5[%c0_18, %c0_19] : memref<128x128xf32, #tpu.memory_space<vmem>>, vector<128x128xf32>
      %cst_20 = arith.constant dense<0.000000e+00> : vector<2x128xf32>
      %22 = tpu.matmul %20, %21, %cst_20 {dimension_numbers = #tpu.dot_dimension_numbers<[1], [0], [0], [1], [0, 0, 1, 1], [], []>} : vector<2x128xf32>, vector<128x128xf32>, vector<2x128xf32> -> vector<2x128xf32>
      %c0_21 = arith.constant 0 : index
      %c0_22 = arith.constant 0 : index
      %23 = vector.load %arg6[%c0_21, %c0_22] : memref<1x128xf32, #tpu.memory_space<vmem>>, vector<1x128xf32>
      %24 = vector.broadcast %23 : vector<1x128xf32> to vector<2x128xf32>
      %25 = arith.addf %22, %24 : vector<2x128xf32>
      %26 = arith.mulf %25, %25 : vector<2x128xf32>
      %cst_23 = arith.constant dense<0.000000e+00> : vector<2xf32>
      %27 = vector.multi_reduction <add>, %26, %cst_23 [1] : vector<2x128xf32> to vector<2xf32>
      %28 = vector.shape_cast %27 : vector<2xf32> to vector<2x1xf32>
      %cst_24 = arith.constant 9.99999996E-13 : f32
      %29 = vector.broadcast %cst_24 : f32 to vector<2x1xf32>
      %30 = arith.addf %28, %29 : vector<2x1xf32>
      %31 = math.rsqrt %30 : vector<2x1xf32>
      %32 = vector.broadcast %31 : vector<2x1xf32> to vector<2x128xf32>
      %33 = arith.mulf %25, %32 : vector<2x128xf32>
      %c0_25 = arith.constant 0 : index
      %c0_26 = arith.constant 0 : index
      %34 = vector.load %arg7[%c0_25, %c0_26] : memref<2x128xf32, #tpu.memory_space<vmem>>, vector<2x128xf32>
      tpu.vector_store %arg7[%c0_25, %c0_26], %33 {strides = array<i32>} : memref<2x128xf32, #tpu.memory_space<vmem>>, vector<2x128xf32>,
    } else {
    }
    return
  }
  func.func @transform_0(%arg0: i32, %arg1: i32) -> (i32, i32, i32) {
    %c0_i32 = arith.constant 0 : i32
    %c0_i32_0 = arith.constant 0 : i32
    return %arg0, %arg1, %c0_i32 : i32, i32, i32
  }
  func.func @transform_1(%arg0: i32, %arg1: i32) -> (i32, i32) {
    %c0_i32 = arith.constant 0 : i32
    %c0_i32_0 = arith.constant 0 : i32
    %c0_i32_1 = arith.constant 0 : i32
    return %c0_i32, %c0_i32_0 : i32, i32
  }
  func.func @transform_2(%arg0: i32, %arg1: i32) -> (i32, i32) {
    %c0_i32 = arith.constant 0 : i32
    %c0_i32_0 = arith.constant 0 : i32
    %c0_i32_1 = arith.constant 0 : i32
    return %c0_i32, %c0_i32_0 : i32, i32
  }
  func.func @transform_3(%arg0: i32, %arg1: i32) -> (i32, i32) {
    %c0_i32 = arith.constant 0 : i32
    %c0_i32_0 = arith.constant 0 : i32
    %c0_i32_1 = arith.constant 0 : i32
    return %c0_i32, %c0_i32_0 : i32, i32
  }
  func.func @transform_4(%arg0: i32, %arg1: i32) -> (i32, i32) {
    %c0_i32 = arith.constant 0 : i32
    %c0_i32_0 = arith.constant 0 : i32
    %c0_i32_1 = arith.constant 0 : i32
    return %c0_i32, %c0_i32_0 : i32, i32
  }
  func.func @transform_5(%arg0: i32, %arg1: i32) -> (i32, i32) {
    %c0_i32 = arith.constant 0 : i32
    %c0_i32_0 = arith.constant 0 : i32
    return %arg0, %c0_i32 : i32, i32
  }
}

</mosaic_0001>

<llo_original>
// kernel: wrapped_model_forward.1
$region0: #{wrapped_model_forward.1}
  #allocation0 [shape = 'u32[]', space=smem, size = 0x4, offset = 0x4, fixed_abs, tag = 'smem constant byte address 0x4 - core index']
  #allocation1 [shape = 'u32[144,128]{1,0:T(1,128)}', space=vmem, size = 0x12000, scoped, tag = 'internal scratch']
  #allocation2 [shape = 'f32[2,32]{1,0:T(2,128)}', space=vmem, size = 0x400, scoped, tag = 'scratch operand']
  %s0 = inlined_call_operand.hbm [shape: f32[2,8,32], index: 0, kind: input, shape index: {}]
  %s1 = inlined_call_operand.hbm [shape: f32[32,128], index: 1, kind: input, shape index: {}]
  %s2 = inlined_call_operand.vmem [shape: f32[1,128], index: 2, kind: input, shape index: {}]
  %s3 = inlined_call_operand.hbm [shape: f32[128,128], index: 3, kind: input, shape index: {}]
  %s4 = inlined_call_operand.vmem [shape: f32[1,128], index: 4, kind: input, shape index: {}]
  %s5 = inlined_call_operand.hbm [shape: f32[2,128], index: 5, kind: output, shape index: {}]
  %s6 = sld [smem:[#allocation0]]
  $region50: #{wrapped_model_forward.1} parent=0
    _
  %s8 = ssub.s32 1, %s6
  %s9 = scalar_select 0, %s8, %s6
  $region1: #{wrapped_model_forward.1} parent=0
    #allocation3 [shape = 'u8[8192]{0}', space=vmem, size = 0x2000, scoped, tag = 'input window, operand 0, single buffered']
    #allocation4 [shape = 's32[1]{0}', space=sflag, size = 0x4, scoped, tag = 'scoped memory for wrapped_model_forward.1']
    #allocation5 [shape = 's32[1]{0}', space=sflag, size = 0x4, scoped, tag = 'scoped memory for wrapped_model_forward.1']
    #allocation6 [shape = 'u8[16384]{0}', space=vmem, size = 0x4000, scoped, tag = 'input window, operand 1, single buffered']
    #allocation7 [shape = 's32[1]{0}', space=sflag, size = 0x4, scoped, tag = 'scoped memory for wrapped_model_forward.1']
    #allocation8 [shape = 'u8[65536]{0}', space=vmem, size = 0x10000, scoped, tag = 'input window, operand 3, single buffered']
    #allocation9 [shape = 'u8[1024]{0}', space=vmem, size = 0x400, scoped, tag = 'output window, operand 0, single buffered']
    %10 = vsyncpa [#allocation4], 0
    %11 = vsyncpa [#allocation7], 0
    %12 = vsyncpa [#allocation5], 0
    // Predicated region
    $region2: #{wrapped_model_forward.1} parent=1 // pred_check
      _
    $region3: #{wrapped_model_forward.1} parent=1 // pred_check_branch
      %14 = sbr.rel (0) target = $region5
    $region4: #{wrapped_model_forward.1} parent=1 // pred_region
      %s16 = ssub.s32 256, 256
      %17 = vsyncadd [#allocation4], %s16
      %s18 = sshll.u32 [#allocation3], 4
      %s19 = int_to_ptr.vmem [resolvable:$true] %s18
      %24 = dma.hbm_to_vmem [thread:$0]  %s0, 256, %s19, [#allocation4], 128, 128, 8
    $region5: #{wrapped_model_forward.1} parent=1 // pred_fallthru
      _
    // Predicated region
    $region6: #{wrapped_model_forward.1} parent=1 // pred_check
      _
    $region7: #{wrapped_model_forward.1} parent=1 // pred_check_branch
      %26 = sbr.rel (0) target = $region9
    $region8: #{wrapped_model_forward.1} parent=1 // pred_region
      %s28 = ssub.s32 512, 512
      %29 = vsyncadd [#allocation7], %s28
      %s30 = sshll.u32 [#allocation6], 4
      %s31 = int_to_ptr.vmem [resolvable:$true] %s30
      %36 = dma.hbm_to_vmem [thread:$0]  %s1, 512, %s31, [#allocation7], 128, 128, 8
    $region9: #{wrapped_model_forward.1} parent=1 // pred_fallthru
      _
    // Predicated region
    $region10: #{wrapped_model_forward.1} parent=1 // pred_check
      _
    $region11: #{wrapped_model_forward.1} parent=1 // pred_check_branch
      %38 = sbr.rel (0) target = $region13
    $region12: #{wrapped_model_forward.1} parent=1 // pred_region
      _
    $region13: #{wrapped_model_forward.1} parent=1 // pred_fallthru
      _
    // Predicated region
    $region14: #{wrapped_model_forward.1} parent=1 // pred_check
      _
    $region15: #{wrapped_model_forward.1} parent=1 // pred_check_branch
      %40 = sbr.rel (0) target = $region17
    $region16: #{wrapped_model_forward.1} parent=1 // pred_region
      %s42 = ssub.s32 2048, 2048
      %43 = vsyncadd [#allocation7], %s42
      %s44 = sshll.u32 [#allocation8], 4
      %s45 = int_to_ptr.vmem [resolvable:$true] %s44
      %50 = dma.hbm_to_vmem [thread:$0]  %s3, 2048, %s45, [#allocation7], 128, 128, 8
    $region17: #{wrapped_model_forward.1} parent=1 // pred_fallthru
      _
    // Predicated region
    $region18: #{wrapped_model_forward.1} parent=1 // pred_check
      _
    $region19: #{wrapped_model_forward.1} parent=1 // pred_check_branch
      %52 = sbr.rel (0) target = $region21
    $region20: #{wrapped_model_forward.1} parent=1 // pred_region
      _
    $region21: #{wrapped_model_forward.1} parent=1 // pred_fallthru
      _
    // Predicated region
    $region22: #{wrapped_model_forward.1} parent=1 // pred_check
      _
    $region23: #{wrapped_model_forward.1} parent=1 // pred_check_branch
      %54 = sbr.rel (0) target = $region25
    $region24: #{wrapped_model_forward.1} parent=1 // pred_region
      %55 = dma.done [#allocation4], 256
    $region25: #{wrapped_model_forward.1} parent=1 // pred_fallthru
      _
    // Predicated region
    $region26: #{wrapped_model_forward.1} parent=1 // pred_check
      _
    $region27: #{wrapped_model_forward.1} parent=1 // pred_check_branch
      %57 = sbr.rel (0) target = $region29
    $region28: #{wrapped_model_forward.1} parent=1 // pred_region
      %58 = dma.done [#allocation7], 512
    $region29: #{wrapped_model_forward.1} parent=1 // pred_fallthru
      _
    // Predicated region
    $region30: #{wrapped_model_forward.1} parent=1 // pred_check
      _
    $region31: #{wrapped_model_forward.1} parent=1 // pred_check_branch
      %60 = sbr.rel (0) target = $region33
    $region32: #{wrapped_model_forward.1} parent=1 // pred_region
      %61 = dma.done [#allocation7], 2048
    $region33: #{wrapped_model_forward.1} parent=1 // pred_fallthru
      _
    %p62 = scmp.eq.s32.totalorder 0, 0
    // Predicated region
    $region34: #{wrapped_model_forward.1} parent=1 // pred_check
      %p63 = pneg %p62
    $region35: #{wrapped_model_forward.1} parent=1 // pred_check_branch
      %65 = sbr.rel (%p63) target = $region37
    $region36: #{wrapped_model_forward.1} parent=1 // pred_region
      %vm66 = vcmask 254976
      %67 = vst.msk [vmem:[#allocation2] sm:$0x3] %vm66, 0.0
    $region37: #{wrapped_model_forward.1} parent=1 // pred_fallthru
      _
    %v68 = vld [vmem:[#allocation3] sm:$0xff]
    %v69 = vld [vmem:[#allocation3 + $0x8] sm:$0xff]
    %v70 = vld [vmem:[#allocation2] sm:$0x3]
    %vm71 = vcmask 261120
    %v72 = vsel %vm71, %v68, 0.0
    %v73 = vrot.slane %v72, 4
    %v74 = vadd.f32 %v72, %v73
    %v75 = vrot.slane %v74, 2
    %v76 = vadd.f32 %v74, %v75
    %v77 = vrot.slane %v76, 1
    %v78 = vadd.f32 %v76, %v77
    %v79 = vsel %vm71, %v69, 0.0
    %v80 = vrot.slane %v79, 4
    %v81 = vadd.f32 %v79, %v80
    %v82 = vrot.slane %v81, 2
    %v83 = vadd.f32 %v81, %v82
    %v84 = vrot.slane %v83, 1
    %v85 = vadd.f32 %v83, %v84
    %vm88 = vcmask 1041409
    %v89 = vsel %vm88, %v85, %v78
    %v91 = vadd.f32 %v70, %v89
    %vm92 = vcmask 254976
    %93 = vst.msk [vmem:[#allocation2] sm:$0x3] %vm92, %v91
    // Predicated region
    $region38: #{wrapped_model_forward.1} parent=1 // pred_check
      %p94 = pneg %p62
    $region39: #{wrapped_model_forward.1} parent=1 // pred_check_branch
      %96 = sbr.rel (%p94) target = $region41
    $region40: #{wrapped_model_forward.1} parent=1 // pred_region
      %v97 = vld [vmem:[#allocation2] sm:$0x3]
      %v98 = vmul.f32 %v97, 0.125
      %v99 = vld [vmem:[#allocation6] sm:$0xff]
      %v100 = vld [vmem:[#allocation6 + $0x8] sm:$0xff]
      %v101 = vld [vmem:[#allocation6 + $0x10] sm:$0xff]
      %v102 = vld [vmem:[#allocation6 + $0x18] sm:$0xff]
      %v103 = vld [vmem:[%s2] sm:$0x1]
      %v105 = vlaneseq
      %v106 = vshrl.u32 %v105, 7
      %v107 = vsub.s32 0, %v106
      %v108 = vrot.slane %v103, %v107
      %v111 = vsel %vm71, %v98, 0
      %113 = vmatprep.subr.mxu0 0.0
      %114 = vmatpush1.msra.mxu0 %v99
      %115 = vmatprep.subr.mxu0 0.0
      %116 = vmatpush1.msra.mxu0 %v100
      %117 = vmatprep.subr.mxu0 0.0
      %118 = vmatpush1.msra.mxu0 %v101
      %119 = vmatprep.subr.mxu0 0.0
      %120 = vmatpush1.msra.mxu0 %v102
      %121 = vmatprep.subr.mxu0 0.0
      %122 = vmatpush1.msra.mxu0 0.0
      %123 = vmatprep.subr.mxu0 0.0
      %124 = vmatpush1.msra.mxu0 0.0
      %125 = vmatprep.subr.mxu0 0.0
      %126 = vmatpush1.msra.mxu0 0.0
      %127 = vmatprep.subr.mxu0 0.0
      %128 = vmatpush1.msra.mxu0 0.0
      %129 = vmatprep.subr.mxu0 0.0
      %130 = vmatpush1.msra.mxu0 0.0
      %131 = vmatprep.subr.mxu0 0.0
      %132 = vmatpush1.msra.mxu0 0.0
      %133 = vmatprep.subr.mxu0 0.0
      %134 = vmatpush1.msra.mxu0 0.0
      %135 = vmatprep.subr.mxu0 0.0
      %136 = vmatpush1.msra.mxu0 0.0
      %137 = vmatprep.subr.mxu0 0.0
      %138 = vmatpush1.msra.mxu0 0.0
      %139 = vmatprep.subr.mxu0 0.0
      %140 = vmatpush1.msra.mxu0 0.0
      %141 = vmatprep.subr.mxu0 0.0
      %142 = vmatpush1.msra.mxu0 0.0
      %143 = vmatprep.subr.mxu0 0.0
      %144 = vmatpush1.msra.mxu0 0.0
      %145 = vmatprep.subr.mxu0 0.0
      %146 = vmatpush1.msra.mxu0 0.0
      %147 = vmatprep.subr.mxu0 0.0
      %148 = vmatpush1.msra.mxu0 0.0
      %149 = vmatprep.subr.mxu0 0.0
      %150 = vmatpush1.msra.mxu0 0.0
      %151 = vmatprep.subr.mxu0 0.0
      %152 = vmatpush1.msra.mxu0 0.0
      %153 = vmatprep.subr.mxu0 0.0
      %154 = vmatpush1.msra.mxu0 0.0
      %155 = vmatprep.subr.mxu0 0.0
      %156 = vmatpush1.msra.mxu0 0.0
      %157 = vmatprep.subr.mxu0 0.0
      %158 = vmatpush1.msra.mxu0 0.0
      %159 = vmatprep.subr.mxu0 0.0
      %160 = vmatpush1.msra.mxu0 0.0
      %161 = vmatprep.subr.mxu0 0.0
      %162 = vmatpush1.msra.mxu0 0.0
      %163 = vmatprep.subr.mxu0 0.0
      %164 = vmatpush1.msra.mxu0 0.0
      %165 = vmatprep.subr.mxu0 0.0
      %166 = vmatpush1.msra.mxu0 0.0
      %167 = vmatprep.subr.mxu0 0.0
      %168 = vmatpush1.msra.mxu0 0.0
      %169 = vmatprep.subr.mxu0 0.0
      %170 = vmatpush1.msra.mxu0 0.0
      %171 = vmatprep.subr.mxu0 0.0
      %172 = vmatpush1.msra.mxu0 0.0
      %173 = vmatprep.subr.mxu0 0.0
      %174 = vmatpush1.msra.mxu0 0.0
      %175 = vmatprep.subr.mxu0 0.0
      %176 = vmatpush1.msra.mxu0 0.0
      %177 = vmatprep.mubr.f32.mxu0 0.0
      %178 = vmatmul.mubr.f32.gmra.mrb[0].mxu0 %v111
      %v179 = vpop.f32.mrb[0].mxu0
      %v180 = vadd.f32 %v108, %v179
      %v181 = vpop.f32.mrb[0].mxu0
      %182 = vdwg.mxu0
      %v183 = vmax.f32 %v180, 0.0
      %v184 = vld [vmem:[#allocation8] sm:$0xff]
      %v185 = vld [vmem:[#allocation8 + $0x8] sm:$0xff]
      %v186 = vld [vmem:[#allocation8 + $0x10] sm:$0xff]
      %v187 = vld [vmem:[#allocation8 + $0x18] sm:$0xff]
      %v188 = vld [vmem:[#allocation8 + $0x20] sm:$0xff]
      %v189 = vld [vmem:[#allocation8 + $0x28] sm:$0xff]
      %v190 = vld [vmem:[#allocation8 + $0x30] sm:$0xff]
      %v191 = vld [vmem:[#allocation8 + $0x38] sm:$0xff]
      %v192 = vld [vmem:[#allocation8 + $0x40] sm:$0xff]
      %v193 = vld [vmem:[#allocation8 + $0x48] sm:$0xff]
      %v194 = vld [vmem:[#allocation8 + $0x50] sm:$0xff]
      %v195 = vld [vmem:[#allocation8 + $0x58] sm:$0xff]
      %v196 = vld [vmem:[#allocation8 + $0x60] sm:$0xff]
      %v197 = vld [vmem:[#allocation8 + $0x68] sm:$0xff]
      %v198 = vld [vmem:[#allocation8 + $0x70] sm:$0xff]
      %v199 = vld [vmem:[#allocation8 + $0x78] sm:$0xff]
      %v200 = vld [vmem:[%s4] sm:$0x1]
      %v202 = vlaneseq
      %v203 = vshrl.u32 %v202, 7
      %v204 = vsub.s32 0, %v203
      %v205 = vrot.slane %v200, %v204
      %207 = vmatprep.subr.mxu0 0.0
      %208 = vmatpush1.msra.mxu0 %v184
      %209 = vmatprep.subr.mxu0 0.0
      %210 = vmatpush1.msra.mxu0 %v185
      %211 = vmatprep.subr.mxu0 0.0
      %212 = vmatpush1.msra.mxu0 %v186
      %213 = vmatprep.subr.mxu0 0.0
      %214 = vmatpush1.msra.mxu0 %v187
      %215 = vmatprep.subr.mxu0 0.0
      %216 = vmatpush1.msra.mxu0 %v188
      %217 = vmatprep.subr.mxu0 0.0
      %218 = vmatpush1.msra.mxu0 %v189
      %219 = vmatprep.subr.mxu0 0.0
      %220 = vmatpush1.msra.mxu0 %v190
      %221 = vmatprep.subr.mxu0 0.0
      %222 = vmatpush1.msra.mxu0 %v191
      %223 = vmatprep.subr.mxu0 0.0
      %224 = vmatpush1.msra.mxu0 %v192
      %225 = vmatprep.subr.mxu0 0.0
      %226 = vmatpush1.msra.mxu0 %v193
      %227 = vmatprep.subr.mxu0 0.0
      %228 = vmatpush1.msra.mxu0 %v194
      %229 = vmatprep.subr.mxu0 0.0
      %230 = vmatpush1.msra.mxu0 %v195
      %231 = vmatprep.subr.mxu0 0.0
      %232 = vmatpush1.msra.mxu0 %v196
      %233 = vmatprep.subr.mxu0 0.0
      %234 = vmatpush1.msra.mxu0 %v197
      %235 = vmatprep.subr.mxu0 0.0
      %236 = vmatpush1.msra.mxu0 %v198
      %237 = vmatprep.subr.mxu0 0.0
      %238 = vmatpush1.msra.mxu0 %v199
      %239 = vmatprep.subr.mxu0 0.0
      %240 = vmatpush1.msra.mxu0 0.0
      %241 = vmatprep.subr.mxu0 0.0
      %242 = vmatpush1.msra.mxu0 0.0
      %243 = vmatprep.subr.mxu0 0.0
      %244 = vmatpush1.msra.mxu0 0.0
      %245 = vmatprep.subr.mxu0 0.0
      %246 = vmatpush1.msra.mxu0 0.0
      %247 = vmatprep.subr.mxu0 0.0
      %248 = vmatpush1.msra.mxu0 0.0
      %249 = vmatprep.subr.mxu0 0.0
      %250 = vmatpush1.msra.mxu0 0.0
      %251 = vmatprep.subr.mxu0 0.0
      %252 = vmatpush1.msra.mxu0 0.0
      %253 = vmatprep.subr.mxu0 0.0
      %254 = vmatpush1.msra.mxu0 0.0
      %255 = vmatprep.subr.mxu0 0.0
      %256 = vmatpush1.msra.mxu0 0.0
      %257 = vmatprep.subr.mxu0 0.0
      %258 = vmatpush1.msra.mxu0 0.0
      %259 = vmatprep.subr.mxu0 0.0
      %260 = vmatpush1.msra.mxu0 0.0
      %261 = vmatprep.subr.mxu0 0.0
      %262 = vmatpush1.msra.mxu0 0.0
      %263 = vmatprep.subr.mxu0 0.0
      %264 = vmatpush1.msra.mxu0 0.0
      %265 = vmatprep.subr.mxu0 0.0
      %266 = vmatpush1.msra.mxu0 0.0
      %267 = vmatprep.subr.mxu0 0.0
      %268 = vmatpush1.msra.mxu0 0.0
      %269 = vmatprep.subr.mxu0 0.0
      %270 = vmatpush1.msra.mxu0 0.0
      %271 = vmatprep.mubr.f32.mxu0 0.0
      %272 = vmatmul.mubr.f32.gmra.mrb[0].mxu0 %v183
      %v273 = vpop.f32.mrb[0].mxu0
      %v274 = vadd.f32 %v205, %v273
      %v275 = vpop.f32.mrb[0].mxu0
      %276 = vdwg.mxu0
      %v277 = vmul.f32 %v274, %v274
      %vm278 = vcmask 1041408
      %v279 = vsel %vm278, %v277, 0.0
      %280 = vadd.xlane.f32.xlu0 %v279
      %v281 = vpop.xlane.xlu0 %280
      %v282 = vadd.f32 %v281, 1e-12
      %v283 = vrsqrt.pop %v282
      %v284 = vmul.f32 %v274, %v283
      %285 = vst [vmem:[#allocation9] sm:$0x3] %v284
    $region41: #{wrapped_model_forward.1} parent=1 // pred_fallthru
      _
    // Predicated region
    $region42: #{wrapped_model_forward.1} parent=1 // pred_check
      _
    $region43: #{wrapped_model_forward.1} parent=1 // pred_check_branch
      %287 = sbr.rel (0) target = $region45
    $region44: #{wrapped_model_forward.1} parent=1 // pred_region
      %s289 = ssub.s32 32, 32
      %290 = vsyncadd [#allocation5], %s289
      %s292 = sshll.u32 [#allocation9], 4
      %s293 = int_to_ptr.vmem [resolvable:$true] %s292
      %295 = dma.vmem_to_hbm [thread:$0]  %s293, 32, %s5, [#allocation5]
    $region45: #{wrapped_model_forward.1} parent=1 // pred_fallthru
      _
    // Predicated region
    $region46: #{wrapped_model_forward.1} parent=1 // pred_check
      _
    $region47: #{wrapped_model_forward.1} parent=1 // pred_check_branch
      %297 = sbr.rel (0) target = $region49
    $region48: #{wrapped_model_forward.1} parent=1 // pred_region
      %298 = dma.done [#allocation5], 32
    $region49: #{wrapped_model_forward.1} parent=1 // pred_fallthru
      _
    %299 = vsyncpa [#allocation4], 1
    %300 = vsyncpa [#allocation7], 1
    %301 = vsyncpa [#allocation5], 1

</llo_original>
